<compile_context>
chip_gen: v7x
topology: tpu7x:2x2x1
jax: 0.10.0
libtpu: 0.0.40
codegen_flags: <defaults>
</compile_context>

<pallas_src>
import functools

import numpy as np
import jax
import jax.numpy as jnp
from jax import lax
from jax.experimental import pallas as pl
from jax.experimental.pallas import tpu as pltpu


def time_embed_kernel(t_ref, inv_f_ref, w_ref, b_ref, o_ref, *, half):
    """swish( concat(sin(t/f), cos(t/f)) @ W.T + b ) for one row-tile of t.

    t_ref:     [tb, 1]  f32 timestamps
    inv_f_ref: [1, D]   f32 (1/factor, duplicated so inv_f[i] = 1/10000**((i%half)/half))
    w_ref:     [D, D]   bf16 torch-layout Linear weight ([out, in])
    b_ref:     [1, D]   f32 bias
    o_ref:     [tb, D]  f32 output
    """
    t = t_ref[...]                                              # [tb, 1] f32
    arg = t * inv_f_ref[...]                                    # [tb, D] f32 (one VPU mul)

    # Lane-select instead of concat: lanes [0, half) -> sin, [half, D) -> cos.
    lane = lax.broadcasted_iota(jnp.int32, arg.shape, 1)        # [tb, D]
    emb = jnp.where(lane < half, jnp.sin(arg), jnp.cos(arg))    # [tb, D] f32, dense lanes

    # y = emb @ W.T + b, contracting against torch-layout W directly on the MXU
    # (dimension_numbers contract dim 1 of both operands == transposed RHS).
    y = lax.dot_general(
        emb.astype(w_ref.dtype), w_ref[...],
        dimension_numbers=(((1,), (1,)), ((), ())),
        preferred_element_type=jnp.float32,
    ) + b_ref[...]                                              # [tb, D] f32

    # Swish in f32 on the VPU/EUP.
    o_ref[...] = y * jax.nn.sigmoid(y)


def time_embed(t, weight, bias, *, block_b=None, weight_dtype=jnp.bfloat16):
    """t: [B] float timestamps. weight: [D, D] torch Linear.weight. bias: [D]."""
    B = t.shape[0]
    D = weight.shape[0]
    half = D // 2
    assert D % 2 == 0 and weight.shape == (D, D) and bias.shape == (D,)

    # Row tiling (single grid step at small B; scales + parallelizes across TCs if B grows).
    if block_b is None:
        block_b = B if B <= 256 else 256
    assert B % block_b == 0, "pad B to a multiple of block_b"
    grid = (B // block_b,)

    t2 = t.astype(jnp.float32).reshape(B, 1)

    # Trace-time constant: inv_factor[i] = 1 / 10000**((i mod half)/half), length D.
    inv_half = 1.0 / (10000.0 ** (np.arange(half, dtype=np.float32) / np.float32(half)))
    inv_factor = jnp.asarray(np.concatenate([inv_half, inv_half])[None, :], jnp.float32)

    w = jnp.asarray(weight, weight_dtype)              # torch layout [D_out, D_in], bf16 DMA
    b2 = jnp.asarray(bias, jnp.float32).reshape(1, D)

    kernel = functools.partial(time_embed_kernel, half=half)

    # TODO(synk): if D is ever >= ~2048, tile the DxD weight over N/K with a grid
    # (a full f32 4096x4096 block would exceed v7x's 64 MiB VMEM) instead of one block.
    return pl.pallas_call(
        kernel,
        out_shape=jax.ShapeDtypeStruct((B, D), jnp.float32),
        grid=grid,
        in_specs=[
            pl.BlockSpec((block_b, 1), lambda i: (i, 0)),   # t rows (tiled over grid)
            pl.BlockSpec((1, D), lambda i: (0, 0)),          # inv_factor (resident)
            pl.BlockSpec((D, D), lambda i: (0, 0)),          # weight (resident across rows)
            pl.BlockSpec((1, D), lambda i: (0, 0)),          # bias (resident)
        ],
        out_specs=pl.BlockSpec((block_b, D), lambda i: (i, 0)),
        compiler_params=pltpu.CompilerParams(
            dimension_semantics=("parallel",)),              # split row tiles across TCs (v7x)
    )(t2, inv_factor, w, b2)


def reference_time_embed(t, weight, bias):
    """Pure-JAX reference matching the PyTorch forward exactly (f32 end-to-end)."""
    D = weight.shape[0]
    half = D // 2
    factor = 10000.0 ** (jnp.arange(half, dtype=jnp.float32) / half)
    t_emb = t.astype(jnp.float32)[:, None] / factor
    t_emb = jnp.concatenate([jnp.sin(t_emb), jnp.cos(t_emb)], axis=-1)
    y = t_emb @ weight.T + bias
    return y * jax.nn.sigmoid(y)


if __name__ == "__main__":
    B = 8
    D = 128  # t_embed_dim

    key = jax.random.PRNGKey(0)
    k_w, k_b, k_t = jax.random.split(key, 3)

    # Deterministic synthetic parameters (torch Linear shapes: weight [D, D], bias [D]).
    bound = 1.0 / jnp.sqrt(D)
    weight = jax.random.uniform(k_w, (D, D), jnp.float32, -bound, bound)
    bias = jax.random.uniform(k_b, (D,), jnp.float32, -bound, bound)

    # Timestamps (e.g. diffusion steps).
    t = jax.random.randint(k_t, (B,), 0, 1000).astype(jnp.float32)

    out = time_embed(t, weight, bias)
    out = jax.block_until_ready(out)

    ref = reference_time_embed(t, weight, bias)
    assert out.shape == (B, D)
    # Tolerance accounts for the bf16 weight/embedding operands (f32 MXU accumulation).
    assert jnp.allclose(out, ref, atol=2e-2, rtol=2e-2), float(jnp.max(jnp.abs(out - ref)))

    print("KERNEL_OK")
</pallas_src>

<mosaic_0001>
module attributes {stable_mosaic.version = 11 : i64} {
  func.func @time_embed_kernel(%arg0: i32, %arg1: memref<8x1xf32, #tpu.memory_space<vmem>>, %arg2: memref<1x128xf32, #tpu.memory_space<vmem>>, %arg3: memref<128x128xbf16, #tpu.memory_space<vmem>>, %arg4: memref<1x128xf32, #tpu.memory_space<vmem>>, %arg5: memref<8x128xf32, #tpu.memory_space<vmem>>) attributes {dimension_semantics = [#tpu.dimension_semantics<parallel>], iteration_bounds = array<i64: 1>, scalar_prefetch = 0 : i64, scratch_operands = 0 : i64, tpu.core_type = #tpu.core_type<tc>, window_params = [{transform_indices = @transform_0, window_bounds = array<i64: 8, 1>}, {pipeline_mode = #tpu.pipeline_mode<synchronous>, transform_indices = @transform_1, window_bounds = array<i64: 1, 128>}, {pipeline_mode = #tpu.pipeline_mode<synchronous>, transform_indices = @transform_2, window_bounds = array<i64: 128, 128>}, {pipeline_mode = #tpu.pipeline_mode<synchronous>, transform_indices = @transform_3, window_bounds = array<i64: 1, 128>}, {transform_indices = @transform_4, window_bounds = array<i64: 8, 128>}]} {
    %c0 = arith.constant 0 : index
    %c0_0 = arith.constant 0 : index
    %0 = vector.load %arg1[%c0, %c0_0] : memref<8x1xf32, #tpu.memory_space<vmem>>, vector<8x1xf32>
    %c0_1 = arith.constant 0 : index
    %c0_2 = arith.constant 0 : index
    %1 = vector.load %arg2[%c0_1, %c0_2] : memref<1x128xf32, #tpu.memory_space<vmem>>, vector<1x128xf32>
    %2 = vector.broadcast %0 : vector<8x1xf32> to vector<8x128xf32>
    %3 = vector.broadcast %1 : vector<1x128xf32> to vector<8x128xf32>
    %4 = arith.mulf %2, %3 : vector<8x128xf32>
    %5 = tpu.iota {dimensions = array<i32: 1>} : vector<8x128xi32>
    %c64_i32 = arith.constant 64 : i32
    %6 = vector.broadcast %c64_i32 : i32 to vector<8x128xi32>
    %7 = arith.cmpi slt, %5, %6 : vector<8x128xi32>
    %8 = math.sin %4 : vector<8x128xf32>
    %9 = math.cos %4 : vector<8x128xf32>
    %10 = arith.select %7, %8, %9 : vector<8x128xi1>, vector<8x128xf32>
    %11 = arith.truncf %10 : vector<8x128xf32> to vector<8x128xbf16>
    %c0_3 = arith.constant 0 : index
    %c0_4 = arith.constant 0 : index
    %12 = vector.load %arg3[%c0_3, %c0_4] : memref<128x128xbf16, #tpu.memory_space<vmem>>, vector<128x128xbf16>
    %cst = arith.constant dense<0.000000e+00> : vector<8x128xf32>
    %13 = tpu.matmul %11, %12, %cst {dimension_numbers = #tpu.dot_dimension_numbers<[1], [1], [0], [0], [0, 0, 1, 0], [], []>} : vector<8x128xbf16>, vector<128x128xbf16>, vector<8x128xf32> -> vector<8x128xf32>
    %c0_5 = arith.constant 0 : index
    %c0_6 = arith.constant 0 : index
    %14 = vector.load %arg4[%c0_5, %c0_6] : memref<1x128xf32, #tpu.memory_space<vmem>>, vector<1x128xf32>
    %15 = vector.broadcast %14 : vector<1x128xf32> to vector<8x128xf32>
    %16 = arith.addf %13, %15 : vector<8x128xf32>
    %17 = arith.negf %16 : vector<8x128xf32>
    %18 = math.exp %17 : vector<8x128xf32>
    %cst_7 = arith.constant 1.000000e+00 : f32
    %19 = vector.broadcast %cst_7 : f32 to vector<8x128xf32>
    %20 = arith.addf %19, %18 : vector<8x128xf32>
    %21 = arith.divf %19, %20 : vector<8x128xf32>
    %22 = arith.mulf %16, %21 : vector<8x128xf32>
    %c0_8 = arith.constant 0 : index
    %c0_9 = arith.constant 0 : index
    %23 = vector.load %arg5[%c0_8, %c0_9] : memref<8x128xf32, #tpu.memory_space<vmem>>, vector<8x128xf32>
    tpu.vector_store %arg5[%c0_8, %c0_9], %22 {strides = array<i32>} : memref<8x128xf32, #tpu.memory_space<vmem>>, vector<8x128xf32>,
    return
  }
  func.func @transform_0(%arg0: i32) -> (i32, i32) {
    %c0_i32 = arith.constant 0 : i32
    %c0_i32_0 = arith.constant 0 : i32
    return %arg0, %c0_i32 : i32, i32
  }
  func.func @transform_1(%arg0: i32) -> (i32, i32) {
    %c0_i32 = arith.constant 0 : i32
    %c0_i32_0 = arith.constant 0 : i32
    %c0_i32_1 = arith.constant 0 : i32
    return %c0_i32, %c0_i32_0 : i32, i32
  }
  func.func @transform_2(%arg0: i32) -> (i32, i32) {
    %c0_i32 = arith.constant 0 : i32
    %c0_i32_0 = arith.constant 0 : i32
    %c0_i32_1 = arith.constant 0 : i32
    return %c0_i32, %c0_i32_0 : i32, i32
  }
  func.func @transform_3(%arg0: i32) -> (i32, i32) {
    %c0_i32 = arith.constant 0 : i32
    %c0_i32_0 = arith.constant 0 : i32
    %c0_i32_1 = arith.constant 0 : i32
    return %c0_i32, %c0_i32_0 : i32, i32
  }
  func.func @transform_4(%arg0: i32) -> (i32, i32) {
    %c0_i32 = arith.constant 0 : i32
    %c0_i32_0 = arith.constant 0 : i32
    return %arg0, %c0_i32 : i32, i32
  }
}

</mosaic_0001>

<llo_original>
// kernel: tpu_custom_call.1
$region0: #{tpu_custom_call.1}
  #allocation0 [shape = 'u32[]', space=smem, size = 0x4, offset = 0x4, fixed_abs, tag = 'smem constant byte address 0x4 - core index']
  #allocation1 [shape = 'u32[144,128]{1,0:T(1,128)}', space=vmem, size = 0x12000, scoped, tag = 'internal scratch']
  %s0 = inlined_call_operand.vmem [shape: f32[8,1], index: 0, kind: input, shape index: {}]
  %s1 = inlined_call_operand.vmem [shape: f32[1,128], index: 1, kind: input, shape index: {}]
  %s2 = inlined_call_operand.hbm [shape: bf16[128,128], index: 2, kind: input, shape index: {}]
  %s3 = inlined_call_operand.vmem [shape: f32[1,128], index: 3, kind: input, shape index: {}]
  %s4 = inlined_call_operand.hbm [shape: f32[8,128], index: 4, kind: output, shape index: {}]
  %s5 = sld [smem:[#allocation0]]
  $region30: #{tpu_custom_call.1} parent=0
    _
  %s7 = ssub.s32 1, %s5
  %s8 = scalar_select 0, %s7, %s5
  $region1: #{tpu_custom_call.1} parent=0
    #allocation2 [shape = 'u8[32768]{0}', space=vmem, size = 0x8000, scoped, tag = 'input window, operand 2, single buffered']
    #allocation3 [shape = 's32[1]{0}', space=sflag, size = 0x4, scoped, tag = 'scoped memory for tpu_custom_call.1']
    #allocation4 [shape = 's32[1]{0}', space=sflag, size = 0x4, scoped, tag = 'scoped memory for tpu_custom_call.1']
    #allocation5 [shape = 'u8[4096]{0}', space=vmem, size = 0x1000, scoped, tag = 'output window, operand 0, single buffered']
    %9 = vsyncpa [#allocation3], 0
    %10 = vsyncpa [#allocation4], 0
    // Predicated region
    $region2: #{tpu_custom_call.1} parent=1 // pred_check
      _
    $region3: #{tpu_custom_call.1} parent=1 // pred_check_branch
      %12 = sbr.rel (0) target = $region5
    $region4: #{tpu_custom_call.1} parent=1 // pred_region
      _
    $region5: #{tpu_custom_call.1} parent=1 // pred_fallthru
      _
    // Predicated region
    $region6: #{tpu_custom_call.1} parent=1 // pred_check
      _
    $region7: #{tpu_custom_call.1} parent=1 // pred_check_branch
      %14 = sbr.rel (0) target = $region9
    $region8: #{tpu_custom_call.1} parent=1 // pred_region
      _
    $region9: #{tpu_custom_call.1} parent=1 // pred_fallthru
      _
    // Predicated region
    $region10: #{tpu_custom_call.1} parent=1 // pred_check
      _
    $region11: #{tpu_custom_call.1} parent=1 // pred_check_branch
      %16 = sbr.rel (0) target = $region13
    $region12: #{tpu_custom_call.1} parent=1 // pred_region
      %s18 = ssub.s32 1024, 1024
      %19 = vsyncadd [#allocation3], %s18
      %s20 = sshll.u32 [#allocation2], 4
      %s21 = int_to_ptr.vmem [resolvable:$true] %s20
      %26 = dma.hbm_to_vmem [thread:$0]  %s2, 1024, %s21, [#allocation3], 64, 64, 4
    $region13: #{tpu_custom_call.1} parent=1 // pred_fallthru
      _
    // Predicated region
    $region14: #{tpu_custom_call.1} parent=1 // pred_check
      _
    $region15: #{tpu_custom_call.1} parent=1 // pred_check_branch
      %28 = sbr.rel (0) target = $region17
    $region16: #{tpu_custom_call.1} parent=1 // pred_region
      _
    $region17: #{tpu_custom_call.1} parent=1 // pred_fallthru
      _
    // Predicated region
    $region18: #{tpu_custom_call.1} parent=1 // pred_check
      _
    $region19: #{tpu_custom_call.1} parent=1 // pred_check_branch
      %30 = sbr.rel (0) target = $region21
    $region20: #{tpu_custom_call.1} parent=1 // pred_region
      %31 = dma.done [#allocation3], 1024
    $region21: #{tpu_custom_call.1} parent=1 // pred_fallthru
      _
    %v33 = vld [vmem:[%s0] sm:$0xff]
    %v34 = vld [vmem:[%s1] sm:$0x1]
    %36 = vset.pattern.permute.xlu0 0
    %37 = vperm.xlu0 %36, %v33
    %v38 = vpop.permute.xlu0 %37
    %v41 = vlaneseq
    %v42 = vshrl.u32 %v41, 7
    %v43 = vsub.s32 0, %v42
    %v44 = vrot.slane %v34, %v43
    %v46 = vmul.f32 %v38, %v44
    %v47 = vlaneseq
    %v48 = vand.u32 %v47, 127
    %vm49 = vcmp.lt.s32.totalorder %v48, 64
    %v50 = vand.u32 2147483647, %v46
    %vm51 = vcmp.le.f32.partialorder %v50, 0.7853982
    %vm52 = vcmp.lt.s32.totalorder %v46, 0
    %v53 = vand.u32 %v46, 2139095040
    %v54 = vshrl.u32 %v53, 23
    %v55 = vsub.s32 %v54, 127
    %v56 = vand.u32 2147483647, %v46
    %v57 = vand.u32 %v56, 8388607
    %v58 = vor.u32 %v57, 8388608
    %v59 = vsub.s32 0, %v58
    %v60 = vadd.s32 %v55, 1
    %vm61 = vcmp.gt.s32.totalorder %v60, 0
    %v62 = vsel %vm61, %v60, 0
    %v63 = vshrl.u32 %v62, 5
    %v64 = vand.u32 %v62, 31
    %v65 = vsub.s32 32, %v64
    %v66 = vshrl.u32 683565275, %v65
    %v67 = vshll.u32 683565275, %v64
    %v68 = vshrl.u32 2475754826, %v65
    %v69 = vor.u32 %v67, %v68
    %v70 = vshll.u32 2475754826, %v64
    %v71 = vshrl.u32 2131351028, %v65
    %v72 = vor.u32 %v70, %v71
    %v73 = vshll.u32 2131351028, %v64
    %v74 = vshrl.u32 2102212464, %v65
    %v75 = vor.u32 %v73, %v74
    %v76 = vshll.u32 2102212464, %v64
    %v77 = vshrl.u32 920167782, %v65
    %v78 = vor.u32 %v76, %v77
    %v79 = vshll.u32 920167782, %v64
    %v80 = vshrl.u32 1326507024, %v65
    %v81 = vor.u32 %v79, %v80
    %vm82 = vcmp.lt.s32.totalorder %v63, 1
    %vm83 = vcmp.lt.s32.totalorder %v63, 2
    %vm84 = vcmp.lt.s32.totalorder %v63, 3
    %vm85 = vcmp.lt.s32.totalorder %v63, 4
    %v86 = vsel %vm82, %v66, %v69
    %v87 = vsel %vm85, %v75, 2102212464
    %v88 = vsel %vm84, %v72, %v87
    %v89 = vsel %vm83, %v86, %v88
    %v90 = vsel %vm82, %v69, %v72
    %v91 = vsel %vm85, %v78, 920167782
    %v92 = vsel %vm84, %v75, %v91
    %v93 = vsel %vm83, %v90, %v92
    %v94 = vsel %vm82, %v72, %v75
    %v95 = vsel %vm85, %v81, 1326507024
    %v96 = vsel %vm84, %v78, %v95
    %v97 = vsel %vm83, %v94, %v96
    %v98 = vshll.u32 %v58, 8
    %v99 = vmul.u32.u64.compose %v98, %v97
    %v100 = vextract.low.u32 %v99
    %v101 = vextract.high.u32 %v99
    %v102 = vmul.u32.u64.compose %v98, %v93
    %v103 = vextract.low.u32 %v102
    %v104 = vextract.high.u32 %v102
    %v105 = vmul.u32 %v98, %v89
    %v106 = vadd.s32 %v101, %v103
    %vm107 = vc.u32 %v101, %v103
    %v108 = vadd.s32 %v104, 1
    %v109 = vsel %vm107, %v108, %v104
    %v110 = vadd.s32 %v105, %v109
    %v111 = vadd.s32 %v110, 536870912
    %v112 = vshrl.u32 %v111, 30
    %v113 = vshll.u32 %v112, 30
    %v114 = vsub.s32 %v110, %v113
    %vm115 = vcmp.lt.s32.totalorder %v114, 0
    %v116 = vsub.s32 0, %v114
    %v117 = vsel %vm115, %v116, %v114
    %v118 = vclz %v117
    %v119 = vsub.s32 %v118, 2
    %vm120 = vcmp.gt.s32.totalorder 0, %v119
    %v121 = vsel %vm120, 0, %v119
    %v122 = vsub.s32 32, %v121
    %v123 = vshll.u32 %v114, %v121
    %v124 = vshrl.u32 %v106, %v122
    %v125 = vor.u32 %v123, %v124
    %v126 = vsub.s32 4294967266, %v121
    %v127 = vadd.s32 %v126, 127
    %v128 = vshll.u32 %v127, 23
    %v129 = vor.u32 4788187, %v128
    %v130 = vand.u32 2147483647, %v129
    %v132 = vcvt.s32.f32 %v125
    %v133 = vmul.f32 %v132, %v130
    %v134 = vxor.u32 %v133, 2147483648
    %v135 = vsel %vm52, %v134, %v133
    %v136 = vsub.s32 4, %v112
    %v137 = vsel %vm52, %v136, %v112
    %v138 = vsel %vm51, %v46, %v135
    %v139 = vsel %vm51, 0, %v137
    %v140 = vcosq.f32.pop %v138
    %v141 = vsinq.f32.pop %v138
    %vm142 = vweird.f32 %v46
    %v143 = vadd.s32 %v139, 3
    %v144 = vand.u32 %v143, 3
    %vm145 = vcmp.lt.s32.totalorder %v144, 2
    %vm146 = vcmp.eq.s32.totalorder %v144, 0
    %v147 = vxor.u32 %v141, 2147483648
    %v148 = vsel %vm146, %v140, %v147
    %vm149 = vcmp.eq.s32.totalorder %v144, 2
    %v150 = vxor.u32 %v140, 2147483648
    %v151 = vsel %vm149, %v150, %v141
    %v152 = vsel %vm145, %v148, %v151
    %v153 = vsel %vm142, nan, %v152
    %v154 = vand.u32 2147483647, %v46
    %vm155 = vcmp.le.f32.partialorder %v154, 0.7853982
    %vm156 = vcmp.lt.s32.totalorder %v46, 0
    %v157 = vand.u32 %v46, 2139095040
    %v158 = vshrl.u32 %v157, 23
    %v159 = vsub.s32 %v158, 127
    %v160 = vand.u32 2147483647, %v46
    %v161 = vand.u32 %v160, 8388607
    %v162 = vor.u32 %v161, 8388608
    %v163 = vsub.s32 0, %v162
    %v164 = vadd.s32 %v159, 1
    %vm165 = vcmp.gt.s32.totalorder %v164, 0
    %v166 = vsel %vm165, %v164, 0
    %v167 = vshrl.u32 %v166, 5
    %v168 = vand.u32 %v166, 31
    %v169 = vsub.s32 32, %v168
    %v170 = vshrl.u32 683565275, %v169
    %v171 = vshll.u32 683565275, %v168
    %v172 = vshrl.u32 2475754826, %v169
    %v173 = vor.u32 %v171, %v172
    %v174 = vshll.u32 2475754826, %v168
    %v175 = vshrl.u32 2131351028, %v169
    %v176 = vor.u32 %v174, %v175
    %v177 = vshll.u32 2131351028, %v168
    %v178 = vshrl.u32 2102212464, %v169
    %v179 = vor.u32 %v177, %v178
    %v180 = vshll.u32 2102212464, %v168
    %v181 = vshrl.u32 920167782, %v169
    %v182 = vor.u32 %v180, %v181
    %v183 = vshll.u32 920167782, %v168
    %v184 = vshrl.u32 1326507024, %v169
    %v185 = vor.u32 %v183, %v184
    %vm186 = vcmp.lt.s32.totalorder %v167, 1
    %vm187 = vcmp.lt.s32.totalorder %v167, 2
    %vm188 = vcmp.lt.s32.totalorder %v167, 3
    %vm189 = vcmp.lt.s32.totalorder %v167, 4
    %v190 = vsel %vm186, %v170, %v173
    %v191 = vsel %vm189, %v179, 2102212464
    %v192 = vsel %vm188, %v176, %v191
    %v193 = vsel %vm187, %v190, %v192
    %v194 = vsel %vm186, %v173, %v176
    %v195 = vsel %vm189, %v182, 920167782
    %v196 = vsel %vm188, %v179, %v195
    %v197 = vsel %vm187, %v194, %v196
    %v198 = vsel %vm186, %v176, %v179
    %v199 = vsel %vm189, %v185, 1326507024
    %v200 = vsel %vm188, %v182, %v199
    %v201 = vsel %vm187, %v198, %v200
    %v202 = vshll.u32 %v162, 8
    %v203 = vmul.u32.u64.compose %v202, %v201
    %v204 = vextract.low.u32 %v203
    %v205 = vextract.high.u32 %v203
    %v206 = vmul.u32.u64.compose %v202, %v197
    %v207 = vextract.low.u32 %v206
    %v208 = vextract.high.u32 %v206
    %v209 = vmul.u32 %v202, %v193
    %v210 = vadd.s32 %v205, %v207
    %vm211 = vc.u32 %v205, %v207
    %v212 = vadd.s32 %v208, 1
    %v213 = vsel %vm211, %v212, %v208
    %v214 = vadd.s32 %v209, %v213
    %v215 = vadd.s32 %v214, 536870912
    %v216 = vshrl.u32 %v215, 30
    %v217 = vshll.u32 %v216, 30
    %v218 = vsub.s32 %v214, %v217
    %vm219 = vcmp.lt.s32.totalorder %v218, 0
    %v220 = vsub.s32 0, %v218
    %v221 = vsel %vm219, %v220, %v218
    %v222 = vclz %v221
    %v223 = vsub.s32 %v222, 2
    %vm224 = vcmp.gt.s32.totalorder 0, %v223
    %v225 = vsel %vm224, 0, %v223
    %v226 = vsub.s32 32, %v225
    %v227 = vshll.u32 %v218, %v225
    %v228 = vshrl.u32 %v210, %v226
    %v229 = vor.u32 %v227, %v228
    %v230 = vsub.s32 4294967266, %v225
    %v231 = vadd.s32 %v230, 127
    %v232 = vshll.u32 %v231, 23
    %v233 = vor.u32 4788187, %v232
    %v234 = vand.u32 2147483647, %v233
    %v236 = vcvt.s32.f32 %v229
    %v237 = vmul.f32 %v236, %v234
    %v238 = vxor.u32 %v237, 2147483648
    %v239 = vsel %vm156, %v238, %v237
    %v240 = vsub.s32 4, %v216
    %v241 = vsel %vm156, %v240, %v216
    %v242 = vsel %vm155, %v46, %v239
    %v243 = vsel %vm155, 0, %v241
    %v244 = vcosq.f32.pop %v242
    %v245 = vsinq.f32.pop %v242
    %vm246 = vweird.f32 %v46
    %v247 = vand.u32 %v243, 3
    %vm248 = vcmp.lt.s32.totalorder %v247, 2
    %vm249 = vcmp.eq.s32.totalorder %v247, 0
    %v250 = vxor.u32 %v245, 2147483648
    %v251 = vsel %vm249, %v244, %v250
    %vm252 = vcmp.eq.s32.totalorder %v247, 2
    %v253 = vxor.u32 %v244, 2147483648
    %v254 = vsel %vm252, %v253, %v245
    %v255 = vsel %vm248, %v251, %v254
    %v256 = vsel %vm246, nan, %v255
    %v257 = vsel %vm49, %v153, %v256
    %v258 = vpack.c.bf16 %v257, %v257
    %v259 = vld [vmem:[#allocation2] sm:$0xf]
    %v260 = vld [vmem:[#allocation2 + $0x4] sm:$0xf]
    %v261 = vld [vmem:[#allocation2 + $0x8] sm:$0xf]
    %v262 = vld [vmem:[#allocation2 + $0xc] sm:$0xf]
    %v263 = vld [vmem:[#allocation2 + $0x10] sm:$0xf]
    %v264 = vld [vmem:[#allocation2 + $0x14] sm:$0xf]
    %v265 = vld [vmem:[#allocation2 + $0x18] sm:$0xf]
    %v266 = vld [vmem:[#allocation2 + $0x1c] sm:$0xf]
    %v267 = vld [vmem:[#allocation2 + $0x20] sm:$0xf]
    %v268 = vld [vmem:[#allocation2 + $0x24] sm:$0xf]
    %v269 = vld [vmem:[#allocation2 + $0x28] sm:$0xf]
    %v270 = vld [vmem:[#allocation2 + $0x2c] sm:$0xf]
    %v271 = vld [vmem:[#allocation2 + $0x30] sm:$0xf]
    %v272 = vld [vmem:[#allocation2 + $0x34] sm:$0xf]
    %v273 = vld [vmem:[#allocation2 + $0x38] sm:$0xf]
    %v274 = vld [vmem:[#allocation2 + $0x3c] sm:$0xf]
    %v275 = vld [vmem:[%s3] sm:$0x1]
    %v277 = vlaneseq
    %v278 = vshrl.u32 %v277, 7
    %v279 = vsub.s32 0, %v278
    %v280 = vrot.slane %v275, %v279
    %v298 = vunpack.c.l.b16 %v259
    %v299 = vunpack.c.l.b16 %v260
    %v300 = vunpack.c.l.b16 %v261
    %v301 = vunpack.c.l.b16 %v262
    %v302 = vunpack.c.l.b16 %v263
    %v303 = vunpack.c.l.b16 %v264
    %v304 = vunpack.c.l.b16 %v265
    %v305 = vunpack.c.l.b16 %v266
    %v306 = vunpack.c.l.b16 %v267
    %v307 = vunpack.c.l.b16 %v268
    %v308 = vunpack.c.l.b16 %v269
    %v309 = vunpack.c.l.b16 %v270
    %v310 = vunpack.c.l.b16 %v271
    %v311 = vunpack.c.l.b16 %v272
    %v312 = vunpack.c.l.b16 %v273
    %v313 = vunpack.c.l.b16 %v274
    %v314 = vpack.c.b16 %v299, %v298
    %v315 = vpack.c.b16 %v301, %v300
    %v316 = vpack.c.b16 %v303, %v302
    %v317 = vpack.c.b16 %v305, %v304
    %v318 = vpack.c.b16 %v307, %v306
    %v319 = vpack.c.b16 %v309, %v308
    %v320 = vpack.c.b16 %v311, %v310
    %v321 = vpack.c.b16 %v313, %v312
    %330 = vmatprep.subr.bf16.mxu0 0
    %331 = vmatpush1.bf16.xpose.msra.mxu0 %v314
    %332 = vmatprep.subr.bf16.mxu0 0
    %333 = vmatpush1.bf16.xpose.msra.mxu0 %v315
    %334 = vmatprep.subr.bf16.mxu0 0
    %335 = vmatpush1.bf16.xpose.msra.mxu0 %v316
    %336 = vmatprep.subr.bf16.mxu0 0
    %337 = vmatpush1.bf16.xpose.msra.mxu0 %v317
    %338 = vmatprep.subr.bf16.mxu0 0
    %339 = vmatpush1.bf16.xpose.msra.mxu0 %v318
    %340 = vmatprep.subr.bf16.mxu0 0
    %341 = vmatpush1.bf16.xpose.msra.mxu0 %v319
    %342 = vmatprep.subr.bf16.mxu0 0
    %343 = vmatpush1.bf16.xpose.msra.mxu0 %v320
    %344 = vmatprep.subr.bf16.mxu0 0
    %345 = vmatpush1.bf16.xpose.msra.mxu0 %v321
    %346 = vmatprep.subr.bf16.mxu0 0
    %347 = vmatpush1.bf16.xpose.msra.mxu0 0
    %348 = vmatprep.subr.bf16.mxu0 0
    %349 = vmatpush1.bf16.xpose.msra.mxu0 0
    %350 = vmatprep.subr.bf16.mxu0 0
    %351 = vmatpush1.bf16.xpose.msra.mxu0 0
    %352 = vmatprep.subr.bf16.mxu0 0
    %353 = vmatpush1.bf16.xpose.msra.mxu0 0
    %354 = vmatprep.subr.bf16.mxu0 0
    %355 = vmatpush1.bf16.xpose.msra.mxu0 0
    %356 = vmatprep.subr.bf16.mxu0 0
    %357 = vmatpush1.bf16.xpose.msra.mxu0 0
    %358 = vmatprep.subr.bf16.mxu0 0
    %359 = vmatpush1.bf16.xpose.msra.mxu0 0
    %360 = vmatprep.subr.bf16.mxu0 0
    %361 = vmatpush1.bf16.xpose.msra.mxu0 0
    %362 = vmatprep.mubr.bf16.mxu0 0
    %363 = vmatmul.mubr.bf16.gmra.mrb[0].mxu0 %v258
    %v364 = vpop.f32.mrb[0].mxu0
    %v365 = vadd.f32 %v280, %v364
    %v366 = vpop.f32.mrb[0].mxu0
    %v367 = vpop.f32.mrb[0].mxu0
    %v368 = vpop.f32.mrb[0].mxu0
    %369 = vdwg.mxu0
    %v370 = vxor.u32 %v365, 2147483648
    %v371 = vmul.f32 %v370, 1.442695
    %v372 = vpow.pop %v371
    %v373 = vadd.f32 %v372, 1.0
    %v374 = vrcp.pop %v373
    %v375 = vmul.f32 1.0, %v374
    %v376 = vmul.f32 %v365, %v375
    %377 = vst [vmem:[#allocation5] sm:$0xff] %v376
    // Predicated region
    $region22: #{tpu_custom_call.1} parent=1 // pred_check
      _
    $region23: #{tpu_custom_call.1} parent=1 // pred_check_branch
      %379 = sbr.rel (0) target = $region25
    $region24: #{tpu_custom_call.1} parent=1 // pred_region
      %s381 = ssub.s32 128, 128
      %382 = vsyncadd [#allocation4], %s381
      %s384 = sshll.u32 [#allocation5], 4
      %s385 = int_to_ptr.vmem [resolvable:$true] %s384
      %387 = dma.vmem_to_hbm [thread:$0]  %s385, 128, %s4, [#allocation4]
    $region25: #{tpu_custom_call.1} parent=1 // pred_fallthru
      _
    // Predicated region
    $region26: #{tpu_custom_call.1} parent=1 // pred_check
      _
    $region27: #{tpu_custom_call.1} parent=1 // pred_check_branch
      %389 = sbr.rel (0) target = $region29
    $region28: #{tpu_custom_call.1} parent=1 // pred_region
      %390 = dma.done [#allocation4], 128
    $region29: #{tpu_custom_call.1} parent=1 // pred_fallthru
      _
    %391 = vsyncpa [#allocation3], 1
    %392 = vsyncpa [#allocation4], 1

</llo_original>
